<compile_context>
chip_gen: v6e
topology: v6e:2x2x1
jax: 0.10.0
libtpu: 0.0.40
codegen_flags: <defaults>
</compile_context>

<pallas_src>
import functools

import jax
import jax.numpy as jnp
from jax.experimental import pallas as pl
from jax.experimental.pallas import tpu as pltpu


_BYTE_BUDGET = 4 * 1024 * 1024  # ~4 MiB per input block (x2 when double-buffered)


def _round_up(x, m):
    return (x + m - 1) // m * m


def _cdiv(a, b):
    return -(-a // b)


def _row_sum_f32(x):
    """Sum a (TR, TL) f32 tile over lanes: VPU adds on 128-lane chunks,
    then a single cross-lane (XLU) reduce."""
    tl = x.shape[-1]
    n_full = tl // 128
    if n_full >= 2:
        acc = x[:, :128]
        for k in range(1, n_full):
            acc = acc + x[:, k * 128:(k + 1) * 128]
        s = jnp.sum(acc, axis=-1, keepdims=True)
        if tl % 128:
            s = s + jnp.sum(x[:, n_full * 128:], axis=-1, keepdims=True)
        return s
    return jnp.sum(x, axis=-1, keepdims=True)


def _single_step_kernel(x_ref, out_ref, *, inv_hw):
    # Whole H*W fits in one lane tile: one-shot row sum, no scratch, 1-D grid.
    x = x_ref[...].astype(jnp.float32)
    out_ref[...] = (_row_sum_f32(x) * inv_hw).astype(out_ref.dtype)


def _multi_step_kernel(x_ref, out_ref, acc_ref, *, inv_hw, L, TL, needs_mask):
    j = pl.program_id(1)  # reduction (H*W tile) axis, last in grid

    @pl.when(j == 0)
    def _():
        acc_ref[...] = jnp.zeros_like(acc_ref)

    x = x_ref[...].astype(jnp.float32)                       # (TR, TL)
    if needs_mask:
        # Only the tail lane tile has out-of-range lanes; zero them exactly.
        lane = jax.lax.broadcasted_iota(jnp.int32, x.shape, 1) + j * TL
        x = jnp.where(lane < L, x, 0.0)

    acc = acc_ref[...]                                       # (TR, 128)
    for k in range(TL // 128):                               # VPU-only adds
        acc = acc + x[:, k * 128:(k + 1) * 128]
    acc_ref[...] = acc

    @pl.when(j == pl.num_programs(1) - 1)
    def _():
        out_ref[...] = (jnp.sum(acc_ref[...], axis=-1, keepdims=True)
                        * inv_hw).astype(out_ref.dtype)


def global_avg_pool2d(x, *, byte_budget=_BYTE_BUDGET):
    """x: (B, C, H, W) -> (B, C, 1, 1), same as F.avg_pool2d(x, (H, W))."""
    B, C, H, W = x.shape
    R, L = B * C, H * W
    itemsize = x.dtype.itemsize
    quantum = max(8, 32 // itemsize)         # sublane quantum: 8 f32 / 16 bf16 / 32 i8
    inv_hw = 1.0 / float(L)

    x2 = x.reshape(R, L)

    # ---- lane (reduction) tile --------------------------------------------
    lane_pad = _round_up(L, 128)             # VMEM lane footprint of a full-L block
    single_step = quantum * lane_pad * itemsize <= byte_budget
    if single_step:
        TL = L                               # full dim: no padding, no masking
        needs_mask = False
    else:
        # Very large feature maps: tile the reduction (multiple of 128 lanes).
        TL = min(lane_pad,
                 max(128, min((byte_budget // (quantum * itemsize)) // 128 * 128,
                              16384)))
        needs_mask = (L % TL) != 0

    # ---- row tile -----------------------------------------------------------
    tl_vmem = _round_up(TL, 128)
    max_tr = max(quantum,
                 (byte_budget // (tl_vmem * itemsize)) // quantum * quantum)
    R_q = _round_up(R, quantum)
    nb_min = 2 if R_q > quantum else 1       # >=2 row blocks so v7x megacore shards
    nb = max(nb_min, _cdiv(R_q, max_tr))
    TR = min(_round_up(_cdiv(R_q, nb), quantum), R_q)
    if TR > R:
        TR = R                               # tiny B*C: single full-dim row block
    grid_r = _cdiv(R, TR)

    cost = pl.CostEstimate(flops=R * L, transcendentals=0,
                           bytes_accessed=R * L * itemsize + R * itemsize)
    out_shape = jax.ShapeDtypeStruct((R, 1), x.dtype)

    if single_step:
        out = pl.pallas_call(
            functools.partial(_single_step_kernel, inv_hw=inv_hw),
            out_shape=out_shape,
            grid_spec=pltpu.PrefetchScalarGridSpec(
                num_scalar_prefetch=0,
                grid=(grid_r,),
                in_specs=[pl.BlockSpec((TR, TL), lambda i: (i, 0))],
                out_specs=pl.BlockSpec((TR, 1), lambda i: (i, 0)),
            ),
            compiler_params=pltpu.CompilerParams(
                dimension_semantics=("parallel",),
                vmem_limit_bytes=32 * 1024 * 1024),
            cost_estimate=cost,
        )(x2)
    else:
        grid_l = _cdiv(L, TL)
        out = pl.pallas_call(
            functools.partial(_multi_step_kernel, inv_hw=inv_hw, L=L, TL=TL,
                              needs_mask=needs_mask),
            out_shape=out_shape,
            grid_spec=pltpu.PrefetchScalarGridSpec(
                num_scalar_prefetch=0,
                grid=(grid_r, grid_l),
                in_specs=[pl.BlockSpec((TR, TL), lambda i, j: (i, j))],
                # Same output block across the reduction axis -> resident output.
                out_specs=pl.BlockSpec((TR, 1), lambda i, j: (i, 0)),
                scratch_shapes=[pltpu.VMEM((TR, 128), jnp.float32)],
            ),
            compiler_params=pltpu.CompilerParams(
                dimension_semantics=("parallel", "arbitrary"),
                vmem_limit_bytes=32 * 1024 * 1024),
            cost_estimate=cost,
        )(x2)

    return out.reshape(B, C, 1, 1)


def _reference(x):
    return jnp.mean(x.astype(jnp.float32),
                    axis=(2, 3), keepdims=True).astype(x.dtype)


if __name__ == "__main__":
    key = jax.random.PRNGKey(0)

    # Primary shape implied by the module's forward.
    B, C, H, W = 2, 4, 16, 16
    x = jax.random.normal(key, (B, C, H, W), dtype=jnp.float32)
    out = jax.block_until_ready(global_avg_pool2d(x))
    assert out.shape == (B, C, 1, 1), out.shape
    assert jnp.allclose(out, _reference(x), atol=1e-5, rtol=1e-5), "mismatch (main)"

    # Typical GAP shape (7x7) with B*C=10: exercises the unpadded partial
    # last row block (garbage rows are clipped on output writeback).
    x2 = jax.random.normal(jax.random.PRNGKey(1), (2, 5, 7, 7), dtype=jnp.float32)
    out2 = jax.block_until_ready(global_avg_pool2d(x2))
    assert jnp.allclose(out2, _reference(x2), atol=1e-5, rtol=1e-5), "mismatch (7x7)"

    # Force the multi-step (accumulator + masked tail lane tile) path with a
    # tiny byte budget to exercise that kernel as well.
    x3 = jax.random.normal(jax.random.PRNGKey(2), (2, 4, 10, 10), dtype=jnp.float32)
    out3 = jax.block_until_ready(global_avg_pool2d(x3, byte_budget=2048))
    assert jnp.allclose(out3, _reference(x3), atol=1e-5, rtol=1e-5), "mismatch (tiled)"

    print("KERNEL_OK")
</pallas_src>

<mosaic_0001>
module attributes {stable_mosaic.version = 11 : i64} {
  func.func @_single_step_kernel(%arg0: i32, %arg1: memref<8x256xf32, #tpu.memory_space<vmem>>, %arg2: memref<8x1xf32, #tpu.memory_space<vmem>>) attributes {dimension_semantics = [#tpu.dimension_semantics<parallel>], iteration_bounds = array<i64: 1>, scalar_prefetch = 0 : i64, scratch_operands = 0 : i64, tpu.core_type = #tpu.core_type<tc>, window_params = [{transform_indices = @transform_0, window_bounds = array<i64: 8, 256>}, {transform_indices = @transform_1, window_bounds = array<i64: 8, 1>}]} {
    %c0 = arith.constant 0 : index
    %c0_0 = arith.constant 0 : index
    %0 = vector.load %arg1[%c0, %c0_0] : memref<8x256xf32, #tpu.memory_space<vmem>>, vector<8x256xf32>
    %1 = vector.extract_strided_slice %0 {offsets = [0, 0], sizes = [8, 128], strides = [1, 1]} : vector<8x256xf32> to vector<8x128xf32>
    %2 = vector.extract_strided_slice %0 {offsets = [0, 128], sizes = [8, 128], strides = [1, 1]} : vector<8x256xf32> to vector<8x128xf32>
    %3 = arith.addf %1, %2 : vector<8x128xf32>
    %cst = arith.constant dense<0.000000e+00> : vector<8xf32>
    %4 = vector.multi_reduction <add>, %3, %cst [1] : vector<8x128xf32> to vector<8xf32>
    %5 = vector.shape_cast %4 : vector<8xf32> to vector<8x1xf32>
    %cst_1 = arith.constant 3.906250e-03 : f32
    %6 = vector.broadcast %cst_1 : f32 to vector<8x1xf32>
    %7 = arith.mulf %5, %6 : vector<8x1xf32>
    %c0_2 = arith.constant 0 : index
    %c0_3 = arith.constant 0 : index
    %8 = vector.load %arg2[%c0_2, %c0_3] : memref<8x1xf32, #tpu.memory_space<vmem>>, vector<8x1xf32>
    tpu.vector_store %arg2[%c0_2, %c0_3], %7 {strides = array<i32>} : memref<8x1xf32, #tpu.memory_space<vmem>>, vector<8x1xf32>,
    return
  }
  func.func @transform_0(%arg0: i32) -> (i32, i32) {
    %c0_i32 = arith.constant 0 : i32
    %c0_i32_0 = arith.constant 0 : i32
    return %arg0, %c0_i32 : i32, i32
  }
  func.func @transform_1(%arg0: i32) -> (i32, i32) {
    %c0_i32 = arith.constant 0 : i32
    %c0_i32_0 = arith.constant 0 : i32
    return %arg0, %c0_i32 : i32, i32
  }
}

</mosaic_0001>

<llo_original>
// kernel: tpu_custom_call.1
$region0: #{tpu_custom_call.1}
  #allocation0 [shape = 'u32[]', space=smem, size = 0x4, offset = 0x4, fixed_abs, tag = 'smem constant byte address 0x4 - core index']
  #allocation1 [shape = 'u32[144,128]{1,0:T(1,128)}', space=vmem, size = 0x12000, scoped, tag = 'internal scratch']
  %s0 = inlined_call_operand.hbm [shape: f32[8,256], index: 0, kind: input, shape index: {}]
  %s1 = inlined_call_operand.vmem [shape: f32[8,1], index: 1, kind: output, shape index: {}]
  %s2 = sld [smem:[#allocation0]]
  $region18: #{tpu_custom_call.1} parent=0
    _
  %s4 = ssub.s32 1, %s2
  %s5 = scalar_select 0, %s4, %s2
  $region1: #{tpu_custom_call.1} parent=0
    #allocation2 [shape = 'u8[8192]{0}', space=vmem, size = 0x2000, scoped, tag = 'input window, operand 0, single buffered']
    #allocation3 [shape = 's32[1]{0}', space=sflag, size = 0x4, scoped, tag = 'scoped memory for tpu_custom_call.1']
    %6 = vsyncpa [#allocation3], 0
    // Predicated region
    $region2: #{tpu_custom_call.1} parent=1 // pred_check
      _
    $region3: #{tpu_custom_call.1} parent=1 // pred_check_branch
      %8 = sbr.rel (0) target = $region5
    $region4: #{tpu_custom_call.1} parent=1 // pred_region
      %s10 = ssub.s32 256, 256
      %11 = vsyncadd [#allocation3], %s10
      %s13 = sshll.u32 [#allocation2], 4
      %s14 = int_to_ptr.vmem [resolvable:$true] %s13
      %16 = dma.hbm_to_vmem [thread:$0]  %s0, 256, %s14, [#allocation3]
    $region5: #{tpu_custom_call.1} parent=1 // pred_fallthru
      _
    // Predicated region
    $region6: #{tpu_custom_call.1} parent=1 // pred_check
      _
    $region7: #{tpu_custom_call.1} parent=1 // pred_check_branch
      %18 = sbr.rel (0) target = $region9
    $region8: #{tpu_custom_call.1} parent=1 // pred_region
      %19 = dma.done [#allocation3], 256
    $region9: #{tpu_custom_call.1} parent=1 // pred_fallthru
      _
    %v20 = vld [vmem:[#allocation2] sm:$0xff]
    %v21 = vld [vmem:[#allocation2 + $0x8] sm:$0xff]
    %v22 = vadd.f32 %v20, %v21
    %23 = vadd.xlane.f32.xlu0 %v22
    %v24 = vpop.xlane.xlu0 %23
    %v25 = vmul.f32 %v24, 0.00390625
    %vm26 = vcmask 7168
    %27 = vst.msk [vmem:[%s1] sm:$0xff] %vm26, %v25
    // Predicated region
    $region10: #{tpu_custom_call.1} parent=1 // pred_check
      _
    $region11: #{tpu_custom_call.1} parent=1 // pred_check_branch
      %29 = sbr.rel (0) target = $region13
    $region12: #{tpu_custom_call.1} parent=1 // pred_region
      _
    $region13: #{tpu_custom_call.1} parent=1 // pred_fallthru
      _
    // Predicated region
    $region14: #{tpu_custom_call.1} parent=1 // pred_check
      _
    $region15: #{tpu_custom_call.1} parent=1 // pred_check_branch
      %31 = sbr.rel (0) target = $region17
    $region16: #{tpu_custom_call.1} parent=1 // pred_region
      _
    $region17: #{tpu_custom_call.1} parent=1 // pred_fallthru
      _
    %32 = vsyncpa [#allocation3], 1

</llo_original>
